<compile_context>
chip_gen: v5e
topology: v5e:2x2
jax: 0.10.0
libtpu: 0.0.40
codegen_flags: <defaults>
</compile_context>

<pallas_src>
import functools

import jax
import jax.numpy as jnp
from jax import lax
from jax.experimental import pallas as pl
from jax.experimental.pallas import tpu as pltpu

_EPS = 1e-12  # matches torch.nn.functional.normalize default eps


def _clip_loss_kernel(f_ref, s_ref, acc_ref, m_ref, l_ref, *,
                      t, tm, tiles_per_core, n_valid, padded, analytic_max):
    p = pl.program_id(0)          # parallel slice (TensorCore on v7x)
    i = pl.program_id(1)          # row tile within the slice (reduction axis)

    # ---- per-slice accumulator init --------------------------------------
    @pl.when(i == 0)
    def _():
        acc_ref[...] = jnp.zeros_like(acc_ref)
        l_ref[...] = jnp.zeros_like(l_ref)
        if analytic_max:
            m_ref[...] = jnp.full_like(m_ref, t)       # constant shift = t
        else:
            m_ref[...] = jnp.full_like(m_ref, -jnp.inf)

    # ---- normalize feature rows (f32), fold in t, feed the MXU bf16 ------
    f = f_ref[...].astype(jnp.float32)
    inv_f = t * lax.rsqrt(
        jnp.maximum(jnp.sum(f * f, axis=-1, keepdims=True), _EPS * _EPS))
    fn = (f * inv_f).astype(jnp.bfloat16)              # (tm, D) bf16
    sn = s_ref[...]                                     # (Bp, D) bf16 (pre-norm)

    # logits tile [tm, Bp]: contract last dims on the MXU (bf16 x bf16 -> f32)
    logits = lax.dot_general(
        fn, sn, dimension_numbers=(((1,), (1,)), ((), ())),
        preferred_element_type=jnp.float32)

    # Diagonal ("correct class") logits of this row tile, O(tm*D), with the
    # same bf16 operand rounding as the matmul.
    row0 = pl.multiple_of((p * tiles_per_core + i) * tm, 8)
    sn_diag = s_ref[pl.ds(row0, tm), :].astype(jnp.float32)
    diag = jnp.sum(fn.astype(jnp.float32) * sn_diag, axis=-1, keepdims=True)

    if padded:
        n_cols = logits.shape[1]
        col_valid = lax.broadcasted_iota(jnp.int32, (tm, n_cols), 1) < n_valid
        row_valid = (row0 + lax.broadcasted_iota(jnp.int32, (tm, 1), 0)) < n_valid

    if analytic_max:
        # |logits| <= t for normalized embeddings -> exp(logits - t) is safe
        # (guarded to t <= 30 in the wrapper). Single exp pass per tile.
        if padded:
            logits = jnp.where(col_valid, logits, -jnp.inf)
        e = jnp.exp(logits - t)                                   # (tm, Bp)
        lse_r = t + jnp.log(jnp.sum(e, axis=-1, keepdims=True))   # (tm, 1)
        contrib = lse_r - 2.0 * diag
        col_e = e
        if padded:
            contrib = jnp.where(row_valid, contrib, 0.0)
            col_e = jnp.where(row_valid, e, 0.0)
        acc_ref[0] += jnp.sum(contrib, axis=0, keepdims=True)     # (1, 1)
        l_ref[0] += jnp.sum(col_e, axis=0, keepdims=True)         # (1, Bp)
    else:
        # Large temperature: per-row max for the row lse and an online
        # column max/sum, robust against exp underflow.
        logits_r = jnp.where(col_valid, logits, -jnp.inf) if padded else logits
        m_row = jnp.max(logits_r, axis=-1, keepdims=True)          # (tm, 1)
        e_r = jnp.exp(logits_r - m_row)
        lse_r = m_row + jnp.log(jnp.sum(e_r, axis=-1, keepdims=True))
        contrib = lse_r - 2.0 * diag
        if padded:
            contrib = jnp.where(row_valid, contrib, 0.0)
        acc_ref[0] += jnp.sum(contrib, axis=0, keepdims=True)

        logits_c = jnp.where(row_valid, logits, -jnp.inf) if padded else logits
        m_col = jnp.max(logits_c, axis=0, keepdims=True)           # (1, Bp)
        m_prev = m_ref[0]
        m_new = jnp.maximum(m_prev, m_col)
        e_c = jnp.exp(logits_c - m_new)
        l_ref[0] = (l_ref[0] * jnp.exp(m_prev - m_new)
                    + jnp.sum(e_c, axis=0, keepdims=True))
        m_ref[0] = m_new


def _round_up(x, m):
    return ((x + m - 1) // m) * m


def _vmem_capacity_bytes():
    try:
        return int(pltpu.get_tpu_info().vmem_capacity_bytes)
    except Exception:
        return 128 * 1024 * 1024


def _vmem_need_bytes(B, D, tm, f_itemsize):
    bp = _round_up(B, tm)
    return (2 * bp * D * 2                 # resident bf16 semantics (double-buffered input)
            + 2 * tm * D * f_itemsize      # feature-tile double buffer
            + 3 * tm * bp * 4              # logits / exp / mask temporaries (f32)
            + 8 * bp * 4)                  # (1, Bp) accumulators + headroom


def _pick_tile(B, D, f_itemsize, vmem_cap_bytes):
    """Generation-aware row tile + scoped-VMEM limit."""
    small_vmem = vmem_cap_bytes <= 80 * 1024 * 1024     # v7x-class (64 MiB VMEM)
    max_tm = 128 if small_vmem else 512                  # 128 MiB parts: go big
    vmem_limit = min((52 if small_vmem else 104) * 1024 * 1024,
                     int(vmem_cap_bytes * 0.85))
    budget = int(vmem_limit * 0.8)
    tm = max_tm
    while tm > 8 and _vmem_need_bytes(B, D, tm, f_itemsize) > budget:
        tm //= 2
    tm = min(tm, _round_up(B, 8))
    return tm, vmem_limit


def clip_loss(feature_embeddings, semantic_embeddings, t_value):
    """feature_embeddings: [B, D], semantic_embeddings: [B, D] -> scalar loss."""
    assert feature_embeddings.shape == semantic_embeddings.shape
    B, D = feature_embeddings.shape
    # t is a trace-time constant of the module: fold it into the per-row scale.
    t = float(t_value)
    analytic_max = t <= 30.0   # |logits| <= t, and 2t stays far from f32 exp underflow

    f_itemsize = jnp.dtype(feature_embeddings.dtype).itemsize
    tm, vmem_limit = _pick_tile(B, D, f_itemsize, _vmem_capacity_bytes())
    Bp = _round_up(B, tm)
    n_tiles = Bp // tm
    n_par = 2 if (n_tiles % 2 == 0 and n_tiles >= 2) else 1   # v7x: 2 TCs
    tiles_per_core = n_tiles // n_par
    padded = Bp != B

    # Pre-normalize semantics in the wrapper (f32 math) and pass bf16: no
    # in-kernel B*D f32 scratch, and the resident semantics footprint halves.
    s32 = semantic_embeddings.astype(jnp.float32)
    inv_s = lax.rsqrt(
        jnp.maximum(jnp.sum(s32 * s32, axis=-1, keepdims=True), _EPS * _EPS))
    sn = (s32 * inv_s).astype(jnp.bfloat16)

    f = feature_embeddings
    if padded:
        f = jnp.pad(f, ((0, Bp - B), (0, 0)))
        sn = jnp.pad(sn, ((0, Bp - B), (0, 0)))

    kernel = functools.partial(
        _clip_loss_kernel, t=t, tm=tm, tiles_per_core=tiles_per_core,
        n_valid=B, padded=padded, analytic_max=analytic_max)

    acc, m_p, l_p = pl.pallas_call(
        kernel,
        out_shape=(
            jax.ShapeDtypeStruct((n_par, 1, 1), jnp.float32),    # sum(lse_r - 2*diag)
            jax.ShapeDtypeStruct((n_par, 1, Bp), jnp.float32),   # partial column max
            jax.ShapeDtypeStruct((n_par, 1, Bp), jnp.float32),   # partial column sum
        ),
        grid_spec=pltpu.PrefetchScalarGridSpec(
            num_scalar_prefetch=0,
            grid=(n_par, tiles_per_core),
            in_specs=[
                # feature row tile, streamed
                pl.BlockSpec((tm, D), lambda p, i: (p * tiles_per_core + i, 0)),
                # pre-normalized bf16 semantics, resident (constant index map)
                pl.BlockSpec((Bp, D), lambda p, i: (0, 0)),
            ],
            out_specs=[
                # per-parallel-slice resident accumulators (index depends on p only)
                pl.BlockSpec((1, 1, 1), lambda p, i: (p, 0, 0)),
                pl.BlockSpec((1, 1, Bp), lambda p, i: (p, 0, 0)),
                pl.BlockSpec((1, 1, Bp), lambda p, i: (p, 0, 0)),
            ]),
        compiler_params=pltpu.CompilerParams(
            # Row-tile axis carries the accumulators -> arbitrary; the leading
            # axis is independent -> parallel (sharded across v7x's 2 TCs).
            dimension_semantics=("parallel", "arbitrary"),
            vmem_limit_bytes=vmem_limit,
        ),
    )(f, sn)

    # ---- O(B) epilogue in XLA: merge per-slice partial column softmaxes ----
    m_p = m_p[:, 0, :B]
    l_p = l_p[:, 0, :B]
    m_max = jnp.max(m_p, axis=0)
    lse_c = m_max + jnp.log(jnp.sum(l_p * jnp.exp(m_p - m_max), axis=0))
    total = jnp.sum(acc) + jnp.sum(lse_c)
    return total * (0.5 / B)


def _reference_clip_loss(f, s, t):
    # Pure-JAX reference mirroring the PyTorch module.
    eps = 1e-12
    fn = f / jnp.maximum(jnp.linalg.norm(f, axis=-1, keepdims=True), eps)
    sn = s / jnp.maximum(jnp.linalg.norm(s, axis=-1, keepdims=True), eps)
    logits = fn @ sn.T * t
    labels = jnp.arange(f.shape[0])

    def ce(lg):
        lse = jax.scipy.special.logsumexp(lg, axis=-1)
        correct = lg[jnp.arange(lg.shape[0]), labels]
        return jnp.mean(lse - correct)

    return (ce(logits) + ce(logits.T)) / 2.0


if __name__ == "__main__":
    # Deterministic parameter: t = exp(log(1 / 0.1)) = 10.0 (as in __init__).
    t_value = float(jnp.exp(jnp.log(1.0 / 0.1)))

    key = jax.random.PRNGKey(0)
    k1, k2, k3, k4 = jax.random.split(key, 4)

    # bf16 MXU operands -> compare against the f32 reference with a bf16-sized
    # tolerance.
    TOL = dict(atol=5e-2, rtol=5e-2)

    # 1) main path: even batch, modest temperature (analytic-max branch)
    B, D = 8, 32
    feature_embeddings = jax.random.normal(k1, (B, D), dtype=jnp.float32)
    semantic_embeddings = jax.random.normal(k2, (B, D), dtype=jnp.float32)
    loss = jax.block_until_ready(
        clip_loss(feature_embeddings, semantic_embeddings, t_value))
    ref = _reference_clip_loss(feature_embeddings, semantic_embeddings, t_value)
    assert jnp.allclose(loss, ref, **TOL), (loss, ref)

    # 2) ragged batch (exercises the padding/masking path)
    Br = 12
    fr = jax.random.normal(k3, (Br, D), dtype=jnp.float32)
    sr = jax.random.normal(k4, (Br, D), dtype=jnp.float32)
    loss_r = jax.block_until_ready(clip_loss(fr, sr, t_value))
    ref_r = _reference_clip_loss(fr, sr, t_value)
    assert jnp.allclose(loss_r, ref_r, **TOL), (loss_r, ref_r)

    # 3) large temperature (exercises the per-row / online-column-max path)
    loss_t = jax.block_until_ready(
        clip_loss(feature_embeddings, semantic_embeddings, 64.0))
    ref_t = _reference_clip_loss(feature_embeddings, semantic_embeddings, 64.0)
    assert jnp.allclose(loss_t, ref_t, **TOL), (loss_t, ref_t)

    print("KERNEL_OK")
</pallas_src>

<mosaic_0001>
module attributes {stable_mosaic.version = 11 : i64} {
  func.func @_clip_loss_kernel(%arg0: i32, %arg1: i32, %arg2: memref<8x32xf32, #tpu.memory_space<vmem>>, %arg3: memref<8x32xbf16, #tpu.memory_space<vmem>>, %arg4: memref<1x1x1xf32, #tpu.memory_space<vmem>>, %arg5: memref<1x1x8xf32, #tpu.memory_space<vmem>>, %arg6: memref<1x1x8xf32, #tpu.memory_space<vmem>>) attributes {dimension_semantics = [#tpu.dimension_semantics<parallel>, #tpu.dimension_semantics<arbitrary>], iteration_bounds = array<i64: 1, 1>, scalar_prefetch = 0 : i64, scratch_operands = 0 : i64, tpu.core_type = #tpu.core_type<tc>, window_params = [{transform_indices = @transform_0, window_bounds = array<i64: 8, 32>}, {pipeline_mode = #tpu.pipeline_mode<synchronous>, transform_indices = @transform_1, window_bounds = array<i64: 8, 32>}, {transform_indices = @transform_2, window_bounds = array<i64: 1, 1, 1>}, {transform_indices = @transform_3, window_bounds = array<i64: 1, 1, 8>}, {transform_indices = @transform_4, window_bounds = array<i64: 1, 1, 8>}]} {
    %c0_i32 = arith.constant 0 : i32
    %0 = arith.cmpi eq, %arg1, %c0_i32 : i32
    %1 = arith.extui %0 : i1 to i32
    %c0_i32_0 = arith.constant 0 : i32
    %2 = arith.cmpi ne, %1, %c0_i32_0 : i32
    scf.if %2 {
      %cst_27 = arith.constant 0.000000e+00 : f32
      %55 = vector.broadcast %cst_27 : f32 to vector<1x1x1xf32>
      %c0_28 = arith.constant 0 : index
      %c0_29 = arith.constant 0 : index
      %c0_30 = arith.constant 0 : index
      %56 = vector.load %arg4[%c0_28, %c0_29, %c0_30] : memref<1x1x1xf32, #tpu.memory_space<vmem>>, vector<1x1x1xf32>
      tpu.vector_store %arg4[%c0_28, %c0_29, %c0_30], %55 {strides = array<i32>} : memref<1x1x1xf32, #tpu.memory_space<vmem>>, vector<1x1x1xf32>,
      %cst_31 = arith.constant 0.000000e+00 : f32
      %57 = vector.broadcast %cst_31 : f32 to vector<1x1x8xf32>
      %c0_32 = arith.constant 0 : index
      %c0_33 = arith.constant 0 : index
      %c0_34 = arith.constant 0 : index
      %58 = vector.load %arg6[%c0_32, %c0_33, %c0_34] : memref<1x1x8xf32, #tpu.memory_space<vmem>>, vector<1x1x8xf32>
      tpu.vector_store %arg6[%c0_32, %c0_33, %c0_34], %57 {strides = array<i32>} : memref<1x1x8xf32, #tpu.memory_space<vmem>>, vector<1x1x8xf32>,
      %cst_35 = arith.constant 1.000000e+01 : f32
      %59 = vector.broadcast %cst_35 : f32 to vector<1x1x8xf32>
      %c0_36 = arith.constant 0 : index
      %c0_37 = arith.constant 0 : index
      %c0_38 = arith.constant 0 : index
      %60 = vector.load %arg5[%c0_36, %c0_37, %c0_38] : memref<1x1x8xf32, #tpu.memory_space<vmem>>, vector<1x1x8xf32>
      tpu.vector_store %arg5[%c0_36, %c0_37, %c0_38], %59 {strides = array<i32>} : memref<1x1x8xf32, #tpu.memory_space<vmem>>, vector<1x1x8xf32>,
    } else {
    }
    %c0 = arith.constant 0 : index
    %c0_1 = arith.constant 0 : index
    %3 = vector.load %arg2[%c0, %c0_1] : memref<8x32xf32, #tpu.memory_space<vmem>>, vector<8x32xf32>
    %4 = arith.mulf %3, %3 : vector<8x32xf32>
    %cst = arith.constant dense<0.000000e+00> : vector<8xf32>
    %5 = vector.multi_reduction <add>, %4, %cst [1] : vector<8x32xf32> to vector<8xf32>
    %6 = vector.shape_cast %5 : vector<8xf32> to vector<8x1xf32>
    %cst_2 = arith.constant 1.000000e-24 : f32
    %7 = vector.broadcast %cst_2 : f32 to vector<8x1xf32>
    %8 = arith.maximumf %6, %7 : vector<8x1xf32>
    %9 = math.rsqrt %8 : vector<8x1xf32>
    %cst_3 = arith.constant 1.000000e+01 : f32
    %10 = vector.broadcast %cst_3 : f32 to vector<8x1xf32>
    %11 = arith.mulf %10, %9 : vector<8x1xf32>
    %12 = vector.broadcast %11 : vector<8x1xf32> to vector<8x32xf32>
    %13 = arith.mulf %3, %12 : vector<8x32xf32>
    %14 = arith.truncf %13 : vector<8x32xf32> to vector<8x32xbf16>
    %c0_4 = arith.constant 0 : index
    %c0_5 = arith.constant 0 : index
    %15 = vector.load %arg3[%c0_4, %c0_5] : memref<8x32xbf16, #tpu.memory_space<vmem>>, vector<8x32xbf16>
    %cst_6 = arith.constant dense<0.000000e+00> : vector<8x8xf32>
    %16 = tpu.matmul %14, %15, %cst_6 {dimension_numbers = #tpu.dot_dimension_numbers<[1], [1], [0], [0], [0, 0, 1, 0], [], []>} : vector<8x32xbf16>, vector<8x32xbf16>, vector<8x8xf32> -> vector<8x8xf32>
    %c1_i32 = arith.constant 1 : i32
    %17 = arith.muli %arg0, %c1_i32 : i32
    %18 = arith.addi %17, %arg1 : i32
    %c8_i32 = arith.constant 8 : i32
    %19 = arith.muli %18, %c8_i32 : i32
    %20 = tpu.assume_multiple %19, 8 : i32
    %21 = arith.index_cast %20 : i32 to index
    %c0_7 = arith.constant 0 : index
    %22 = vector.load %arg3[%21, %c0_7] : memref<8x32xbf16, #tpu.memory_space<vmem>>, vector<8x32xbf16>
    %23 = arith.extf %22 : vector<8x32xbf16> to vector<8x32xf32>
    %24 = arith.extf %14 : vector<8x32xbf16> to vector<8x32xf32>
    %25 = arith.mulf %24, %23 : vector<8x32xf32>
    %cst_8 = arith.constant dense<0.000000e+00> : vector<8xf32>
    %26 = vector.multi_reduction <add>, %25, %cst_8 [1] : vector<8x32xf32> to vector<8xf32>
    %27 = vector.shape_cast %26 : vector<8xf32> to vector<8x1xf32>
    %cst_9 = arith.constant 1.000000e+01 : f32
    %28 = vector.broadcast %cst_9 : f32 to vector<8x8xf32>
    %29 = arith.subf %16, %28 : vector<8x8xf32>
    %30 = math.exp %29 : vector<8x8xf32>
    %cst_10 = arith.constant dense<0.000000e+00> : vector<8xf32>
    %31 = vector.multi_reduction <add>, %30, %cst_10 [1] : vector<8x8xf32> to vector<8xf32>
    %32 = vector.shape_cast %31 : vector<8xf32> to vector<8x1xf32>
    %33 = math.log %32 : vector<8x1xf32>
    %cst_11 = arith.constant 1.000000e+01 : f32
    %34 = vector.broadcast %cst_11 : f32 to vector<8x1xf32>
    %35 = arith.addf %34, %33 : vector<8x1xf32>
    %cst_12 = arith.constant 2.000000e+00 : f32
    %36 = vector.broadcast %cst_12 : f32 to vector<8x1xf32>
    %37 = arith.mulf %36, %27 : vector<8x1xf32>
    %38 = arith.subf %35, %37 : vector<8x1xf32>
    %c0_13 = arith.constant 0 : index
    %c0_14 = arith.constant 0 : index
    %c0_15 = arith.constant 0 : index
    %39 = vector.load %arg4[%c0_13, %c0_14, %c0_15] : memref<1x1x1xf32, #tpu.memory_space<vmem>>, vector<1x1x1xf32>
    %40 = vector.shape_cast %39 : vector<1x1x1xf32> to vector<1x1xf32>
    %cst_16 = arith.constant dense<0.000000e+00> : vector<1xf32>
    %41 = vector.multi_reduction <add>, %38, %cst_16 [0] : vector<8x1xf32> to vector<1xf32>
    %42 = vector.shape_cast %41 : vector<1xf32> to vector<1x1xf32>
    %43 = arith.addf %40, %42 : vector<1x1xf32>
    %c0_17 = arith.constant 0 : index
    %c0_18 = arith.constant 0 : index
    %c0_19 = arith.constant 0 : index
    %44 = vector.load %arg4[%c0_17, %c0_18, %c0_19] : memref<1x1x1xf32, #tpu.memory_space<vmem>>, vector<1x1x1xf32>
    %45 = vector.shape_cast %44 : vector<1x1x1xf32> to vector<1x1xf32>
    %46 = vector.shape_cast %43 : vector<1x1xf32> to vector<1x1x1xf32>
    tpu.vector_store %arg4[%c0_17, %c0_18, %c0_19], %46 {strides = array<i32>} : memref<1x1x1xf32, #tpu.memory_space<vmem>>, vector<1x1x1xf32>,
    %c0_20 = arith.constant 0 : index
    %c0_21 = arith.constant 0 : index
    %c0_22 = arith.constant 0 : index
    %47 = vector.load %arg6[%c0_20, %c0_21, %c0_22] : memref<1x1x8xf32, #tpu.memory_space<vmem>>, vector<1x1x8xf32>
    %48 = vector.shape_cast %47 : vector<1x1x8xf32> to vector<1x8xf32>
    %cst_23 = arith.constant dense<0.000000e+00> : vector<8xf32>
    %49 = vector.multi_reduction <add>, %30, %cst_23 [0] : vector<8x8xf32> to vector<8xf32>
    %50 = vector.shape_cast %49 : vector<8xf32> to vector<1x8xf32>
    %51 = arith.addf %48, %50 : vector<1x8xf32>
    %c0_24 = arith.constant 0 : index
    %c0_25 = arith.constant 0 : index
    %c0_26 = arith.constant 0 : index
    %52 = vector.load %arg6[%c0_24, %c0_25, %c0_26] : memref<1x1x8xf32, #tpu.memory_space<vmem>>, vector<1x1x8xf32>
    %53 = vector.shape_cast %52 : vector<1x1x8xf32> to vector<1x8xf32>
    %54 = vector.shape_cast %51 : vector<1x8xf32> to vector<1x1x8xf32>
    tpu.vector_store %arg6[%c0_24, %c0_25, %c0_26], %54 {strides = array<i32>} : memref<1x1x8xf32, #tpu.memory_space<vmem>>, vector<1x1x8xf32>,
    return
  }
  func.func @transform_0(%arg0: i32, %arg1: i32) -> (i32, i32) {
    %c1_i32 = arith.constant 1 : i32
    %0 = arith.muli %arg0, %c1_i32 : i32
    %1 = arith.addi %0, %arg1 : i32
    %c0_i32 = arith.constant 0 : i32
    %c0_i32_0 = arith.constant 0 : i32
    return %1, %c0_i32 : i32, i32
  }
  func.func @transform_1(%arg0: i32, %arg1: i32) -> (i32, i32) {
    %c0_i32 = arith.constant 0 : i32
    %c0_i32_0 = arith.constant 0 : i32
    %c0_i32_1 = arith.constant 0 : i32
    return %c0_i32, %c0_i32_0 : i32, i32
  }
  func.func @transform_2(%arg0: i32, %arg1: i32) -> (i32, i32, i32) {
    %c0_i32 = arith.constant 0 : i32
    %c0_i32_0 = arith.constant 0 : i32
    %c0_i32_1 = arith.constant 0 : i32
    return %arg0, %c0_i32, %c0_i32_0 : i32, i32, i32
  }
  func.func @transform_3(%arg0: i32, %arg1: i32) -> (i32, i32, i32) {
    %c0_i32 = arith.constant 0 : i32
    %c0_i32_0 = arith.constant 0 : i32
    %c0_i32_1 = arith.constant 0 : i32
    return %arg0, %c0_i32, %c0_i32_0 : i32, i32, i32
  }
  func.func @transform_4(%arg0: i32, %arg1: i32) -> (i32, i32, i32) {
    %c0_i32 = arith.constant 0 : i32
    %c0_i32_0 = arith.constant 0 : i32
    %c0_i32_1 = arith.constant 0 : i32
    return %arg0, %c0_i32, %c0_i32_0 : i32, i32, i32
  }
}

</mosaic_0001>

<llo_original>
// kernel: tpu_custom_call.1
$region0: #{tpu_custom_call.1}
  #allocation0 [shape = 'u32[]', space=smem, size = 0x4, offset = 0x4, fixed_abs, tag = 'smem constant byte address 0x4 - core index']
  #allocation1 [shape = 'u32[72,128]{1,0:T(1,128)}', space=vmem, size = 0x9000, scoped, tag = 'internal scratch']
  %s0 = inlined_call_operand.hbm [shape: f32[8,32], index: 0, kind: input, shape index: {}]
  %s1 = inlined_call_operand.hbm [shape: bf16[8,32], index: 1, kind: input, shape index: {}]
  %s2 = inlined_call_operand.hbm [shape: f32[1,1,1], index: 2, kind: output, shape index: {0}]
  %s3 = inlined_call_operand.hbm [shape: f32[1,1,8], index: 3, kind: output, shape index: {1}]
  %s4 = inlined_call_operand.hbm [shape: f32[1,1,8], index: 4, kind: output, shape index: {2}]
  %5 = xla_tuple %s2, %s3, %s4
  %s6 = sld [smem:[#allocation0]]
  $region46: #{tpu_custom_call.1} parent=0
    _
  %s8 = ssub.s32 1, %s6
  %s9 = scalar_select 0, %s8, %s6
  $region1: #{tpu_custom_call.1} parent=0
    #allocation2 [shape = 'u8[4096]{0}', space=vmem, size = 0x1000, scoped, tag = 'input window, operand 0, single buffered']
    #allocation3 [shape = 's32[1]{0}', space=sflag, size = 0x4, scoped, tag = 'scoped memory for tpu_custom_call.1']
    #allocation4 [shape = 's32[1]{0}', space=sflag, size = 0x4, scoped, tag = 'scoped memory for tpu_custom_call.1']
    #allocation5 [shape = 'u8[2048]{0}', space=vmem, size = 0x800, scoped, tag = 'input window, operand 1, single buffered']
    #allocation6 [shape = 's32[1]{0}', space=sflag, size = 0x4, scoped, tag = 'scoped memory for tpu_custom_call.1']
    #allocation7 [shape = 'u8[512]{0}', space=vmem, size = 0x400, scoped, tag = 'output window, operand 0, single buffered']
    #allocation8 [shape = 'u8[512]{0}', space=vmem, size = 0x400, scoped, tag = 'output window, operand 1, single buffered']
    #allocation9 [shape = 's32[1]{0}', space=sflag, size = 0x4, scoped, tag = 'scoped memory for tpu_custom_call.1']
    #allocation10 [shape = 'u8[512]{0}', space=vmem, size = 0x400, scoped, tag = 'output window, operand 2, single buffered']
    %10 = vsyncpa [#allocation3], 0
    %11 = vsyncpa [#allocation6], 0
    %12 = vsyncpa [#allocation4], 0
    %13 = vsyncpa [#allocation9], 0
    // Predicated region
    $region2: #{tpu_custom_call.1} parent=1 // pred_check
      _
    $region3: #{tpu_custom_call.1} parent=1 // pred_check_branch
      %15 = sbr.rel (0) target = $region5
    $region4: #{tpu_custom_call.1} parent=1 // pred_region
      %s16 = sadd.s32 0, 0
      %18 = vsyncadd [#allocation3], 0
      %s19 = smul.addr %s16, 8
      %s20 = scalar_lea.hbm %s0, %s19
      %s22 = sshll.u32 %s20, 4
      %s23 = int_to_ptr.hbm [resolvable:$true] %s22
      %s24 = sshll.u32 [#allocation2], 4
      %s25 = int_to_ptr.vmem [resolvable:$true] %s24
      %27 = dma.hbm_to_vmem [thread:$0]  %s23, 128, %s25, [#allocation3]
    $region5: #{tpu_custom_call.1} parent=1 // pred_fallthru
      _
    // Predicated region
    $region6: #{tpu_custom_call.1} parent=1 // pred_check
      _
    $region7: #{tpu_custom_call.1} parent=1 // pred_check_branch
      %29 = sbr.rel (0) target = $region9
    $region8: #{tpu_custom_call.1} parent=1 // pred_region
      %31 = vsyncadd [#allocation6], 0
      %s33 = sshll.u32 %s1, 4
      %s34 = int_to_ptr.hbm [resolvable:$true] %s33
      %s35 = sshll.u32 [#allocation5], 4
      %s36 = int_to_ptr.vmem [resolvable:$true] %s35
      %38 = dma.hbm_to_vmem [thread:$0]  %s34, 64, %s36, [#allocation6]
    $region9: #{tpu_custom_call.1} parent=1 // pred_fallthru
      _
    // Predicated region
    $region10: #{tpu_custom_call.1} parent=1 // pred_check
      _
    $region11: #{tpu_custom_call.1} parent=1 // pred_check_branch
      %40 = sbr.rel (0) target = $region13
    $region12: #{tpu_custom_call.1} parent=1 // pred_region
      %42 = dma.done [#allocation3], 128
    $region13: #{tpu_custom_call.1} parent=1 // pred_fallthru
      _
    // Predicated region
    $region14: #{tpu_custom_call.1} parent=1 // pred_check
      _
    $region15: #{tpu_custom_call.1} parent=1 // pred_check_branch
      %44 = sbr.rel (0) target = $region17
    $region16: #{tpu_custom_call.1} parent=1 // pred_region
      %46 = dma.done [#allocation6], 64
    $region17: #{tpu_custom_call.1} parent=1 // pred_fallthru
      _
    %s47 = sadd.s32 0, 0
    %p49 = scmp.eq.s32.totalorder 0, 0
    // Predicated region
    $region18: #{tpu_custom_call.1} parent=1 // pred_check
      %p50 = pneg %p49
    $region19: #{tpu_custom_call.1} parent=1 // pred_check_branch
      %52 = sbr.rel (%p50) target = $region21
    $region20: #{tpu_custom_call.1} parent=1 // pred_region
      %vm53 = vcmask 0
      %54 = vst.msk [vmem:[#allocation7] sm:$0x1] %vm53, 0.0
      %vm55 = vcmask 57344
      %56 = vst.msk [vmem:[#allocation10] sm:$0x1] %vm55, 0.0
      %57 = vst.msk [vmem:[#allocation8] sm:$0x1] %vm55, 10.0
    $region21: #{tpu_custom_call.1} parent=1 // pred_fallthru
      _
    %v58 = vld [vmem:[#allocation2] sm:$0xff]
    %v59 = vmul.f32 %v58, %v58
    %vm60 = vcmask 261120
    %v61 = vsel %vm60, %v59, 0.0
    %62 = vadd.xlane.f32.xlu0 %v61
    %v63 = vpop.xlane.xlu0 %62
    %v64 = vmax.f32 %v63, 1e-24
    %v65 = vrsqrt.pop %v64
    %v66 = vmul.f32 %v65, %v64
    %v67 = vmul.f32 %v66, %v65
    %v68 = vmul.f32 0.5, %v67
    %v69 = vsub.f32 1.5, %v68
    %v70 = vmul.f32 %v65, %v69
    %vm71 = vweird.f32 %v64
    %vm72 = vweird.f32 %v65
    %vm73 = vmor %vm71, %vm72
    %v74 = vsel %vm73, %v65, %v70
    %v75 = vmul.f32 %v74, 10.0
    %v76 = vmul.f32 %v58, %v75
    %v77 = vpack.c.bf16 %v76, %v76
    %v78 = vld [vmem:[#allocation5] sm:$0xf]
    %v80 = vsel %vm60, %v77, 0
    %v83 = vsel %vm60, %v78, 0
    %85 = vmatpush.bf16.xpose.msra.mxu0 0
    %86 = vmatpush.bf16.xpose.msra.mxu0 0
    %87 = vmatpush.bf16.xpose.msra.mxu0 0
    %88 = vmatpush.bf16.xpose.msra.mxu0 0
    %89 = vmatpush.bf16.xpose.msra.mxu0 0
    %90 = vmatpush.bf16.xpose.msra.mxu0 0
    %91 = vmatpush.bf16.xpose.msra.mxu0 0
    %92 = vmatpush.bf16.xpose.msra.mxu0 %v83
    %93 = vmatmul.bf16.gmra.mxu0 %v80
    %v94 = vpop.f32.mrf.mxu0
    %v95 = vadd.f32 0.0, %v94
    %v96 = vpop.f32.mrf.mxu0
    %97 = vdwg.mxu0
    %s98 = sadd.s32 0, 0
    %s99 = smul.u32 %s98, 8
    %s100 = sshra.s32 %s99, 3
    %s101 = sand.u32 %s99, 7
    %s102 = smul.addr %s100, 4
    %s103 = scalar_lea.vmem [#allocation5], %s102
    %v104 = vld [vmem:[%s103] sm:$0xf]
    %v105 = vunpack.c.l.bf16 %v104
    %v106 = vunpack.c.l.bf16 %v77
    %v107 = vmul.f32 %v106, %v105
    %v108 = vsel %vm60, %v107, 0.0
    %109 = vadd.xlane.f32.xlu0 %v108
    %v110 = vpop.xlane.xlu0 %109
    %v111 = vsub.f32 %v95, 10.0
    %v112 = vmul.f32 %v111, 1.442695
    %v113 = vpow.pop %v112
    %vm114 = vcmask 64512
    %v115 = vsel %vm114, %v113, 0.0
    %116 = vadd.xlane.f32.xlu0 %v115
    %v117 = vpop.xlane.xlu0 %116
    %v118 = vlog2.pop %v117
    %v119 = vmul.f32 %v118, 0.6931472
    %v120 = vadd.f32 %v119, 10.0
    %v121 = vmul.f32 %v110, 2.0
    %v122 = vsub.f32 %v120, %v121
    %v123 = vld [vmem:[#allocation7] sm:$0x1]
    %v124 = vrot.slane %v122, 4
    %v125 = vadd.f32 %v122, %v124
    %v126 = vrot.slane %v125, 2
    %v127 = vadd.f32 %v125, %v126
    %v128 = vrot.slane %v127, 1
    %v129 = vadd.f32 %v127, %v128
    %v130 = vadd.f32 %v123, %v129
    %vm131 = vcmask 0
    %132 = vst.msk [vmem:[#allocation7] sm:$0x1] %vm131, %v130
    %v133 = vld [vmem:[#allocation10] sm:$0x1]
    %v134 = vrot.slane %v115, 4
    %v135 = vadd.f32 %v115, %v134
    %v136 = vrot.slane %v135, 2
    %v137 = vadd.f32 %v135, %v136
    %v138 = vrot.slane %v137, 1
    %v139 = vadd.f32 %v137, %v138
    %v140 = vadd.f32 %v133, %v139
    %vm141 = vcmask 57344
    %142 = vst.msk [vmem:[#allocation10] sm:$0x1] %vm141, %v140
    // Predicated region
    $region22: #{tpu_custom_call.1} parent=1 // pred_check
      _
    $region23: #{tpu_custom_call.1} parent=1 // pred_check_branch
      %144 = sbr.rel (0) target = $region25
    $region24: #{tpu_custom_call.1} parent=1 // pred_region
      %146 = vsyncadd [#allocation4], 0
      %s148 = sshll.u32 [#allocation7], 4
      %s149 = int_to_ptr.vmem [resolvable:$true] %s148
      %s150 = sshll.u32 %s2, 4
      %s151 = int_to_ptr.hbm [resolvable:$true] %s150
      %153 = dma.vmem_to_hbm [thread:$0]  %s149, 16, %s151, [#allocation4]
    $region25: #{tpu_custom_call.1} parent=1 // pred_fallthru
      _
    // Predicated region
    $region26: #{tpu_custom_call.1} parent=1 // pred_check
      _
    $region27: #{tpu_custom_call.1} parent=1 // pred_check_branch
      %155 = sbr.rel (0) target = $region29
    $region28: #{tpu_custom_call.1} parent=1 // pred_region
      %157 = vsyncadd [#allocation9], 0
      %s159 = sshll.u32 [#allocation8], 4
      %s160 = int_to_ptr.vmem [resolvable:$true] %s159
      %s161 = sshll.u32 %s3, 4
      %s162 = int_to_ptr.hbm [resolvable:$true] %s161
      %164 = dma.vmem_to_hbm [thread:$0]  %s160, 16, %s162, [#allocation9]
    $region29: #{tpu_custom_call.1} parent=1 // pred_fallthru
      _
    // Predicated region
    $region30: #{tpu_custom_call.1} parent=1 // pred_check
      _
    $region31: #{tpu_custom_call.1} parent=1 // pred_check_branch
      %166 = sbr.rel (0) target = $region33
    $region32: #{tpu_custom_call.1} parent=1 // pred_region
      %168 = vsyncadd [#allocation9], 0
      %s170 = sshll.u32 [#allocation10], 4
      %s171 = int_to_ptr.vmem [resolvable:$true] %s170
      %s172 = sshll.u32 %s4, 4
      %s173 = int_to_ptr.hbm [resolvable:$true] %s172
      %175 = dma.vmem_to_hbm [thread:$0]  %s171, 16, %s173, [#allocation9]
    $region33: #{tpu_custom_call.1} parent=1 // pred_fallthru
      _
    // Predicated region
    $region34: #{tpu_custom_call.1} parent=1 // pred_check
      _
    $region35: #{tpu_custom_call.1} parent=1 // pred_check_branch
      %177 = sbr.rel (0) target = $region37
    $region36: #{tpu_custom_call.1} parent=1 // pred_region
      %179 = dma.done [#allocation4], 16
    $region37: #{tpu_custom_call.1} parent=1 // pred_fallthru
      _
    // Predicated region
    $region38: #{tpu_custom_call.1} parent=1 // pred_check
      _
    $region39: #{tpu_custom_call.1} parent=1 // pred_check_branch
      %181 = sbr.rel (0) target = $region41
    $region40: #{tpu_custom_call.1} parent=1 // pred_region
      %183 = dma.done [#allocation9], 16
    $region41: #{tpu_custom_call.1} parent=1 // pred_fallthru
      _
    // Predicated region
    $region42: #{tpu_custom_call.1} parent=1 // pred_check
      _
    $region43: #{tpu_custom_call.1} parent=1 // pred_check_branch
      %185 = sbr.rel (0) target = $region45
    $region44: #{tpu_custom_call.1} parent=1 // pred_region
      %187 = dma.done [#allocation9], 16
    $region45: #{tpu_custom_call.1} parent=1 // pred_fallthru
      _
    %188 = vsyncpa [#allocation3], 1
    %189 = vsyncpa [#allocation6], 1
    %190 = vsyncpa [#allocation4], 1
    %191 = vsyncpa [#allocation9], 1

</llo_original>
